<compile_context>
chip_gen: v5e
topology: v5e:2x2
jax: 0.10.0
libtpu: 0.0.40
codegen_flags: <defaults>
</compile_context>

<pallas_src>
import functools

import jax
import jax.numpy as jnp
from jax.experimental import pallas as pl
from jax.experimental.pallas import tpu as pltpu

_LANES = 128
_SUBLANES = 8
_MAX_BLOCK_ROWS = 2048                  # 2048 * 128 * 4 B = 1 MiB f32 block (tiled path)
_FUSED_MAX_BYTES = 2 * 1024 * 1024      # fused single-block path if padded input <= 2 MiB
_VMEM_LIMIT = 32 * 1024 * 1024          # explicit scoped-VMEM limit (fits v5e/v6e/v7x)
_REDUCE_CORES = 2                       # megacore / dual-TC split of the reduce pass (v7x)


def _round_up(a, b):
    return ((a + b - 1) // b) * b


def _max2d(a):
    """(R, C) -> (1, 1) max via explicit lane-then-sublane reductions."""
    return jnp.max(jnp.max(a, axis=1, keepdims=True), axis=0, keepdims=True)


def _sum2d(a):
    """(R, C) -> (1, 1) sum via explicit lane-then-sublane reductions."""
    return jnp.sum(jnp.sum(a, axis=1, keepdims=True), axis=0, keepdims=True)


# --------------------------- kernels ---------------------------

def _sign_kernel(x_ref, o_ref):
    # w_bit == 2 (k = 1 quantizer): sign(tanh(x)/max|tanh(x)|) == sign(x), so no reduce
    # pass / tanh / divide is needed at all.  where-form matches torch.sign (sign(0) = 0).
    x = x_ref[...]
    one = jnp.ones_like(x)
    o_ref[...] = jnp.where(x > 0, one, jnp.where(x < 0, -one, jnp.zeros_like(x)))


def _fused_kernel(x_ref, o_ref, *, w_bit, num_valid):
    """Whole tensor resident in VMEM: reduce -> scale -> apply in a single kernel."""
    xf = x_ref[...].astype(jnp.float32)
    if w_bit == 1:
        # TODO(synk): faithful to the reference: k = w_bit - 1 = 0 gives n = 0 and an
        # all-NaN result (round(.*0)/0); kept as-is and not exercised by the test harness.
        e = _sum2d(jnp.abs(xf)) * (1.0 / float(num_valid))          # (1, 1) = mean(|x|)
        q = jnp.round(xf * (1.0 / e) * 0.0) / 0.0
        o_ref[...] = ((q + 1.0) * 0.5 * e).astype(o_ref.dtype)
    else:
        n = float(2 ** (w_bit - 1) - 1)
        # max|tanh(x)| == tanh(max|x|): the reduction never touches tanh.
        m = jnp.tanh(_max2d(jnp.abs(xf)))                           # (1, 1)
        scale = n / m                                               # (1, 1) exact divide
        # tanh stays on the EUP slot; the rest is VPU mul/round (mem-bound either way).
        o_ref[...] = (jnp.round(jnp.tanh(xf) * scale) * (1.0 / n)).astype(o_ref.dtype)


def _reduce_kernel(x_ref, r_ref, *, use_sum):
    """Grid (cores, steps): per-core max|x| / sum|x| accumulated into an (8, 128) block."""
    @pl.when(pl.program_id(1) == 0)
    def _():
        r_ref[...] = jnp.zeros_like(r_ref)       # |x| >= 0 and 0 is also sum-neutral
    ax = jnp.abs(x_ref[...].astype(jnp.float32))
    if use_sum:
        r_ref[...] += _sum2d(ax)                 # broadcast of the (1, 1) partial
    else:
        r_ref[...] = jnp.maximum(r_ref[...], _max2d(ax))


def _apply_kernel(red_ref, x_ref, o_ref, *, w_bit, num_valid):
    """Streaming elementwise quantization; combines the per-core partial reductions and
    derives the scale in-kernel (no scalar XLA ops / scalar HBM round trip in between)."""
    xf = x_ref[...].astype(jnp.float32)
    r0 = red_ref[0:1, 0:1]                          # (1, 1) partial from core 0
    r1 = red_ref[_SUBLANES:_SUBLANES + 1, 0:1]      # (1, 1) partial from core 1
    if w_bit == 1:
        # TODO(synk): same faithful divide-by-zero NaN as the reference (n = 0).
        e = (r0 + r1) * (1.0 / float(num_valid))
        q = jnp.round(xf * (1.0 / e) * 0.0) / 0.0
        o_ref[...] = ((q + 1.0) * 0.5 * e).astype(o_ref.dtype)
    else:
        n = float(2 ** (w_bit - 1) - 1)
        m = jnp.tanh(jnp.maximum(r0, r1))           # tanh(max|x|) == max|tanh(x)|
        scale = n / m
        o_ref[...] = (jnp.round(jnp.tanh(xf) * scale) * (1.0 / n)).astype(o_ref.dtype)


# --------------------------- wrapper ---------------------------

def _pad_reshape(x_flat, rows_padded):
    num = x_flat.shape[0]
    padded = rows_padded * _LANES
    if padded != num:
        # Zeros are neutral for both max|x| and sum|x|; sliced off again after the kernel.
        x_flat = jnp.pad(x_flat, (0, padded - num))
    return x_flat.reshape(rows_padded, _LANES), padded


def weight_quantize(x, w_bit, *, force_tiled=False):
    """Forward of weight_quantize_fn(w_bit) on tensor x (any shape).

    `force_tiled=True` is a test hook that forces the large-tensor two-pass path."""
    assert (1 <= w_bit <= 8) or w_bit == 32

    if w_bit == 32:                                  # identity: skip the kernel entirely
        return x

    orig_shape = x.shape
    orig_dtype = x.dtype
    if x.dtype not in (jnp.float32, jnp.bfloat16):   # keep f32/bf16 native (bf16 halves DMA)
        x = x.astype(jnp.float32)
    x_flat = x.reshape(-1)
    num_valid = x_flat.shape[0]
    itemsize = x_flat.dtype.itemsize
    rows = pl.cdiv(num_valid, _LANES)

    # ---------------- w_bit == 2: pure elementwise sign(x), no reduce pass ----------------
    if w_bit == 2:
        block_rows = min(_MAX_BLOCK_ROWS, _round_up(rows, _SUBLANES))
        grid_n = pl.cdiv(rows, block_rows)
        x2d, padded = _pad_reshape(x_flat, grid_n * block_rows)
        out2d = pl.pallas_call(
            _sign_kernel,
            out_shape=jax.ShapeDtypeStruct(x2d.shape, x2d.dtype),
            grid=(grid_n,),
            in_specs=[pl.BlockSpec((block_rows, _LANES), lambda i: (i, 0))],
            out_specs=pl.BlockSpec((block_rows, _LANES), lambda i: (i, 0)),
            compiler_params=pltpu.CompilerParams(
                dimension_semantics=("parallel",),
                vmem_limit_bytes=_VMEM_LIMIT),
        )(x2d)
        out_flat = out2d.reshape(-1)
        if padded != num_valid:
            out_flat = out_flat[:num_valid]
        return out_flat.reshape(orig_shape).astype(orig_dtype)

    # ---------------- w_bit in {1, 3..8}: reduce + apply ----------------
    fused = (not force_tiled) and (
        _round_up(rows, _SUBLANES) * _LANES * itemsize <= _FUSED_MAX_BYTES)

    if fused:
        # Single pallas_call: whole (padded) tensor in VMEM; reduce, scale and apply fused.
        x2d, padded = _pad_reshape(x_flat, _round_up(rows, _SUBLANES))
        out2d = pl.pallas_call(
            functools.partial(_fused_kernel, w_bit=w_bit, num_valid=num_valid),
            out_shape=jax.ShapeDtypeStruct(x2d.shape, x2d.dtype),
            grid=(1,),
            in_specs=[pl.BlockSpec(x2d.shape, lambda i: (0, 0))],
            out_specs=pl.BlockSpec(x2d.shape, lambda i: (0, 0)),
            compiler_params=pltpu.CompilerParams(
                dimension_semantics=("arbitrary",),
                vmem_limit_bytes=_VMEM_LIMIT),
        )(x2d)
    else:
        block_rows = min(_MAX_BLOCK_ROWS, _round_up(rows, _SUBLANES))
        grid_n = pl.cdiv(rows, block_rows)
        steps = pl.cdiv(grid_n, _REDUCE_CORES)
        grid_total = _REDUCE_CORES * steps
        x2d, padded = _pad_reshape(x_flat, grid_total * block_rows)

        # pass 1: per-core partial max|x| / sum|x| ("parallel" outer axis -> both v7x TCs).
        red = pl.pallas_call(
            functools.partial(_reduce_kernel, use_sum=(w_bit == 1)),
            out_shape=jax.ShapeDtypeStruct((_REDUCE_CORES * _SUBLANES, _LANES), jnp.float32),
            grid=(_REDUCE_CORES, steps),
            in_specs=[pl.BlockSpec((block_rows, _LANES),
                                   lambda c, i: (c * steps + i, 0))],
            out_specs=pl.BlockSpec((_SUBLANES, _LANES), lambda c, i: (c, 0)),
            compiler_params=pltpu.CompilerParams(
                dimension_semantics=("parallel", "arbitrary"),
                vmem_limit_bytes=_VMEM_LIMIT),
        )(x2d)

        # pass 2: streaming apply; the (16, 128) partial slab is a constant block (fetched
        # once), combined + turned into the scale inside the kernel.
        out2d = pl.pallas_call(
            functools.partial(_apply_kernel, w_bit=w_bit, num_valid=num_valid),
            out_shape=jax.ShapeDtypeStruct(x2d.shape, x2d.dtype),
            grid=(grid_total,),
            in_specs=[
                pl.BlockSpec((_REDUCE_CORES * _SUBLANES, _LANES), lambda i: (0, 0)),
                pl.BlockSpec((block_rows, _LANES), lambda i: (i, 0)),
            ],
            out_specs=pl.BlockSpec((block_rows, _LANES), lambda i: (i, 0)),
            compiler_params=pltpu.CompilerParams(
                dimension_semantics=("parallel",),
                vmem_limit_bytes=_VMEM_LIMIT),
        )(red, x2d)

    out_flat = out2d.reshape(-1)
    if padded != num_valid:
        out_flat = out_flat[:num_valid]
    return out_flat.reshape(orig_shape).astype(orig_dtype)


# --------------------------- verification ---------------------------

def _uniform_q_ref(x, k):
    if k == 32:
        return x
    if k == 1:
        return jnp.sign(x)
    n = float(2 ** k - 1)
    return jnp.round(x * n) / n


def _reference(x, w_bit):
    """Pure-JAX mirror of the PyTorch forward."""
    if w_bit == 32:
        return x
    x = x.astype(jnp.float32)
    if w_bit == 1:
        E = jnp.mean(jnp.abs(x))
        return (_uniform_q_ref(x / E, w_bit - 1) + 1.0) / 2.0 * E
    w = jnp.tanh(x)
    w = w / jnp.max(jnp.abs(w))
    return _uniform_q_ref(w, w_bit - 1)


def _check(x, w_bit, force_tiled=False):
    out = jax.block_until_ready(weight_quantize(x, w_bit, force_tiled=force_tiled))
    ref = _reference(x, w_bit)
    if out.shape != x.shape:
        return False
    diff = jnp.abs(out.astype(jnp.float32) - ref.astype(jnp.float32))
    if w_bit in (32, 2):
        return bool(jnp.all(diff <= 1e-6))
    # k >= 2 quantizer: identical everywhere except (rare) exact rounding-boundary ties,
    # where the scalar-reciprocal refactor / tanh ulp differences between the XLA reference
    # and the Mosaic kernel may flip the result by exactly one quant step.
    n = float(2 ** (w_bit - 1) - 1)
    step = 1.0 / n
    exact = diff <= 1e-6
    one_step = jnp.abs(diff - step) <= 1e-5
    few = int(jnp.sum(~exact)) <= max(8, x.size // 100)
    return bool(jnp.all(exact | one_step)) and few


if __name__ == "__main__":
    key = jax.random.PRNGKey(0)
    k1, k2, k3 = jax.random.split(key, 3)
    # Conv-style (OIHW) weight tensors to quantize.
    x_small = jax.random.normal(k1, (2, 4, 16, 16), dtype=jnp.float32) * 0.7    # 2048 elems
    x_ragged = jax.random.normal(k2, (5, 7, 3, 3), dtype=jnp.float32) * 1.3     # 315 elems (ragged tail)
    x_multi = jax.random.normal(k3, (32, 16, 16, 16), dtype=jnp.float32) * 0.5  # 131072 elems

    ok = True
    for x in (x_small, x_ragged, x_multi):
        for w_bit in (8, 4, 3, 2, 32):   # round paths, sign shortcut (k=1), identity path
            if not _check(x, w_bit):
                ok = False
    # Exercise the large-tensor tiled path (megacore-split reduce + streaming apply) too.
    for w_bit in (8, 3):
        if not _check(x_multi, w_bit, force_tiled=True):
            ok = False

    # TODO(synk): the w_bit == 1 path reproduces the reference's divide-by-zero NaN
    # (n = 2**0 - 1 = 0) faithfully; it compiles but is not exercised here.

    if ok:
        print("KERNEL_OK")
</pallas_src>

<mosaic_0001>
module attributes {stable_mosaic.version = 11 : i64} {
  func.func @_fused_kernel(%arg0: i32, %arg1: memref<16x128xf32, #tpu.memory_space<vmem>>, %arg2: memref<16x128xf32, #tpu.memory_space<vmem>>) attributes {dimension_semantics = [#tpu.dimension_semantics<arbitrary>], iteration_bounds = array<i64: 1>, scalar_prefetch = 0 : i64, scratch_operands = 0 : i64, tpu.core_type = #tpu.core_type<tc>, window_params = [{pipeline_mode = #tpu.pipeline_mode<synchronous>, transform_indices = @transform_0, window_bounds = array<i64: 16, 128>}, {pipeline_mode = #tpu.pipeline_mode<synchronous>, transform_indices = @transform_1, window_bounds = array<i64: 16, 128>}]} {
    %c0 = arith.constant 0 : index
    %c0_0 = arith.constant 0 : index
    %0 = vector.load %arg1[%c0, %c0_0] : memref<16x128xf32, #tpu.memory_space<vmem>>, vector<16x128xf32>
    %1 = math.absf %0 : vector<16x128xf32>
    %cst = arith.constant dense<0xFF800000> : vector<16xf32>
    %2 = vector.multi_reduction <maximumf>, %1, %cst [1] : vector<16x128xf32> to vector<16xf32>
    %3 = vector.shape_cast %2 : vector<16xf32> to vector<16x1xf32>
    %cst_1 = arith.constant dense<0xFF800000> : vector<1xf32>
    %4 = vector.multi_reduction <maximumf>, %3, %cst_1 [0] : vector<16x1xf32> to vector<1xf32>
    %5 = vector.shape_cast %4 : vector<1xf32> to vector<1x1xf32>
    %6 = math.tanh %5 : vector<1x1xf32>
    %cst_2 = arith.constant 1.270000e+02 : f32
    %7 = vector.broadcast %cst_2 : f32 to vector<1x1xf32>
    %8 = arith.divf %7, %6 : vector<1x1xf32>
    %9 = math.tanh %0 : vector<16x128xf32>
    %10 = vector.broadcast %8 : vector<1x1xf32> to vector<16x128xf32>
    %11 = arith.mulf %9, %10 : vector<16x128xf32>
    %12 = math.roundeven %11 : vector<16x128xf32>
    %cst_3 = arith.constant 0.00787401571 : f32
    %13 = vector.broadcast %cst_3 : f32 to vector<16x128xf32>
    %14 = arith.mulf %12, %13 : vector<16x128xf32>
    %c0_4 = arith.constant 0 : index
    %c0_5 = arith.constant 0 : index
    %15 = vector.load %arg2[%c0_4, %c0_5] : memref<16x128xf32, #tpu.memory_space<vmem>>, vector<16x128xf32>
    tpu.vector_store %arg2[%c0_4, %c0_5], %14 {strides = array<i32>} : memref<16x128xf32, #tpu.memory_space<vmem>>, vector<16x128xf32>,
    return
  }
  func.func @transform_0(%arg0: i32) -> (i32, i32) {
    %c0_i32 = arith.constant 0 : i32
    %c0_i32_0 = arith.constant 0 : i32
    %c0_i32_1 = arith.constant 0 : i32
    return %c0_i32, %c0_i32_0 : i32, i32
  }
  func.func @transform_1(%arg0: i32) -> (i32, i32) {
    %c0_i32 = arith.constant 0 : i32
    %c0_i32_0 = arith.constant 0 : i32
    %c0_i32_1 = arith.constant 0 : i32
    return %c0_i32, %c0_i32_0 : i32, i32
  }
}

</mosaic_0001>

<llo_original>
// kernel: tpu_custom_call.1
$region0: #{tpu_custom_call.1}
  #allocation0 [shape = 'u32[]', space=smem, size = 0x4, offset = 0x4, fixed_abs, tag = 'smem constant byte address 0x4 - core index']
  #allocation1 [shape = 'u32[72,128]{1,0:T(1,128)}', space=vmem, size = 0x9000, scoped, tag = 'internal scratch']
  %s0 = inlined_call_operand.hbm [shape: f32[16,128], index: 0, kind: input, shape index: {}]
  %s1 = inlined_call_operand.hbm [shape: f32[16,128], index: 1, kind: output, shape index: {}]
  %s2 = sld [smem:[#allocation0]]
  $region18: #{tpu_custom_call.1} parent=0
    _
  %s4 = ssub.s32 1, %s2
  %s5 = scalar_select 0, %s4, %s2
  $region1: #{tpu_custom_call.1} parent=0
    #allocation2 [shape = 'u8[8192]{0}', space=vmem, size = 0x2000, scoped, tag = 'input window, operand 0, single buffered']
    #allocation3 [shape = 's32[1]{0}', space=sflag, size = 0x4, scoped, tag = 'scoped memory for tpu_custom_call.1']
    #allocation4 [shape = 's32[1]{0}', space=sflag, size = 0x4, scoped, tag = 'scoped memory for tpu_custom_call.1']
    #allocation5 [shape = 'u8[8192]{0}', space=vmem, size = 0x2000, scoped, tag = 'output window, operand 0, single buffered']
    %6 = vsyncpa [#allocation3], 0
    %7 = vsyncpa [#allocation4], 0
    // Predicated region
    $region2: #{tpu_custom_call.1} parent=1 // pred_check
      _
    $region3: #{tpu_custom_call.1} parent=1 // pred_check_branch
      %9 = sbr.rel (0) target = $region5
    $region4: #{tpu_custom_call.1} parent=1 // pred_region
      %11 = vsyncadd [#allocation3], 0
      %s12 = sshll.u32 %s0, 4
      %s13 = int_to_ptr.hbm [resolvable:$true] %s12
      %s14 = sshll.u32 [#allocation2], 4
      %s15 = int_to_ptr.vmem [resolvable:$true] %s14
      %20 = dma.hbm_to_vmem [thread:$0]  %s13, 256, %s15, [#allocation3], 128, 128, 8
    $region5: #{tpu_custom_call.1} parent=1 // pred_fallthru
      _
    // Predicated region
    $region6: #{tpu_custom_call.1} parent=1 // pred_check
      _
    $region7: #{tpu_custom_call.1} parent=1 // pred_check_branch
      %22 = sbr.rel (0) target = $region9
    $region8: #{tpu_custom_call.1} parent=1 // pred_region
      %24 = dma.done [#allocation3], 256
    $region9: #{tpu_custom_call.1} parent=1 // pred_fallthru
      _
    %v25 = vld [vmem:[#allocation2] sm:$0xff]
    %v26 = vld [vmem:[#allocation2 + $0x8] sm:$0xff]
    %v27 = vand.u32 2147483647, %v25
    %v28 = vand.u32 2147483647, %v26
    %29 = vmax.xlane.f32.xlu0 %v27
    %v30 = vpop.xlane.xlu0 %29
    %31 = vmax.xlane.f32.xlu0 %v28
    %v32 = vpop.xlane.xlu0 %31
    %v33 = vmax.f32 %v30, %v32
    %v34 = vrot.slane %v33, 4
    %v35 = vmax.f32 %v33, %v34
    %v36 = vrot.slane %v35, 2
    %v37 = vmax.f32 %v35, %v36
    %v38 = vrot.slane %v37, 1
    %v39 = vmax.f32 %v37, %v38
    %v40 = vtanh.pop %v39
    %v41 = vrcp.pop %v40
    %v42 = vmul.f32 %v40, %v41
    %v43 = vsub.f32 1.0, %v42
    %v44 = vmul.f32 %v41, %v43
    %v45 = vadd.f32 %v41, %v44
    %vm46 = vweird.f32 %v40
    %vm47 = vweird.f32 %v41
    %vm48 = vmor %vm46, %vm47
    %v49 = vsel %vm48, %v41, %v45
    %v50 = vand.u32 2147483647, %v40
    %vm51 = vcmp.eq.f32.partialorder %v50, 8.507059e+37
    %v52 = vand.u32 %v40, 2147483648
    %v53 = vor.u32 1.1754944e-38, %v52
    %v54 = vsel %vm51, %v53, %v49
    %v55 = vmul.f32 127.0, %v54
    %v56 = vtanh.pop %v25
    %v57 = vtanh.pop %v26
    %v58 = vmul.f32 %v56, %v55
    %v59 = vmul.f32 %v57, %v55
    %v60 = vround.ne.pseudo %v58
    %v61 = vround.ne.pseudo %v59
    %v62 = vmul.f32 %v60, 0.007874016
    %v63 = vmul.f32 %v61, 0.007874016
    %64 = vst [vmem:[#allocation5] sm:$0xff] %v62
    %65 = vst [vmem:[#allocation5 + $0x8] sm:$0xff] %v63
    // Predicated region
    $region10: #{tpu_custom_call.1} parent=1 // pred_check
      _
    $region11: #{tpu_custom_call.1} parent=1 // pred_check_branch
      %67 = sbr.rel (0) target = $region13
    $region12: #{tpu_custom_call.1} parent=1 // pred_region
      %69 = vsyncadd [#allocation4], 0
      %s70 = sshll.u32 [#allocation5], 4
      %s71 = int_to_ptr.vmem [resolvable:$true] %s70
      %s72 = sshll.u32 %s1, 4
      %s73 = int_to_ptr.hbm [resolvable:$true] %s72
      %78 = dma.vmem_to_hbm [thread:$0]  %s71, 256, %s73, [#allocation4], 128, 128, 8
    $region13: #{tpu_custom_call.1} parent=1 // pred_fallthru
      _
    // Predicated region
    $region14: #{tpu_custom_call.1} parent=1 // pred_check
      _
    $region15: #{tpu_custom_call.1} parent=1 // pred_check_branch
      %80 = sbr.rel (0) target = $region17
    $region16: #{tpu_custom_call.1} parent=1 // pred_region
      %82 = dma.done [#allocation4], 256
    $region17: #{tpu_custom_call.1} parent=1 // pred_fallthru
      _
    %83 = vsyncpa [#allocation3], 1
    %84 = vsyncpa [#allocation4], 1

</llo_original>
